<compile_context>
chip_gen: v6e
topology: v6e:2x2x1
jax: 0.10.0
libtpu: 0.0.40
codegen_flags: <defaults>
</compile_context>

<pallas_src>
import functools

import jax
import jax.numpy as jnp
from jax.experimental import pallas as pl
from jax.experimental.pallas import tpu as pltpu


def _attention_gate_kernel(g_ref, s_ref,
                           wg_ref, ws_ref, bgs_ref,
                           wo_ref, bo_ref,
                           out_ref):
    # Channels-first tiles: g_ref (Cg, TP), s_ref (Cs, TP); pixels = lanes.
    # bf16 tiles go straight to the MXU; accumulation is f32.
    g = g_ref[...]
    s = s_ref[...]

    # Wg(g) + Ws(s) + (bg + bs); eval-mode BN already folded into W/b.
    h = jnp.dot(wg_ref[...], g, preferred_element_type=jnp.float32)
    h = h + jnp.dot(ws_ref[...], s, preferred_element_type=jnp.float32)
    h = jnp.maximum(h + bgs_ref[...], 0.0)

    # Output 1x1 conv + exact sigmoid (memory-bound kernel -> exactness free).
    o = jnp.dot(wo_ref[...], h.astype(wo_ref.dtype),
                preferred_element_type=jnp.float32) + bo_ref[...]
    att = 1.0 / (1.0 + jnp.exp(-o))

    # Gate * skip connection; (Cs, TP) store is lane-dense.
    out_ref[...] = (att * s).astype(out_ref.dtype)


def _round_up(x, m):
    return ((x + m - 1) // m) * m


def _vmem_plan(HW, N, Cg, Cs, Co, io_bytes):
    """Pick (tile_p, vmem_limit_bytes) from a generation-aware VMEM budget.

    Accounts for sublane padding, double-buffered activation *and* weight
    blocks, and the f32 intermediates (h / o / att) that live during compute.
    """
    try:
        phys = pltpu.get_tpu_info().vmem_capacity_bytes
    except Exception:
        phys = 64 * 1024 * 1024          # conservative fallback (v7x-sized)
    budget = int(phys) * 5 // 8          # ~40 MiB on v7x, ~80 MiB on v5e/v6e

    # --- fixed-cost blocks (constant index_map, still double-buffered) ---
    sub_io = 16 if io_bytes == 2 else 8          # bf16 packs 16 rows / vreg
    cg_l, cs_l, co_l = (_round_up(Cg, 128), _round_up(Cs, 128),
                        _round_up(Co, 128))
    co_sio = _round_up(Co, sub_io)
    co_s8 = _round_up(Co, 8)
    w_bytes = 2 * (co_sio * cg_l + co_sio * cs_l + co_sio * co_l) * io_bytes
    b_bytes = 2 * 2 * (co_s8 * 128) * 4          # bgs + bo, f32

    # --- per-pixel (per-lane) cost ---
    cg_s, cs_s = _round_up(Cg, sub_io), _round_up(Cs, sub_io)
    per_p = 2 * (cg_s + 2 * cs_s) * io_bytes     # g + s + out, double-buffered
    per_p += 4 * co_s8 * 4                       # f32 intermediates h/o/att

    avail = budget - w_bytes - b_bytes - (2 << 20)   # 2 MiB headroom
    cap = max(128, min(32768, avail // max(per_p, 1)))
    cap = (cap // 128) * 128                     # lane-aligned stores

    if HW <= cap:
        tile_p = HW          # full-row block (allowed even if HW % 128 != 0)
    else:
        tile_p = cap         # multiple of 128; tail tile masked on store

    # v7x megacore: make sure the grid has >= 2 steps so both TCs get work.
    n_ptiles = -(-HW // tile_p)
    if N * n_ptiles < 2 and HW >= 256:
        tile_p = max(128, (((HW + 1) // 2) // 128) * 128)

    return tile_p, budget


@functools.partial(jax.jit, static_argnames=("tile_p", "io_dtype"))
def attention_gate(g, s, params, tile_p=None, io_dtype=jnp.bfloat16):
    """g: (N, Cg, H, W), s: (N, Cs, H, W) NCHW. Returns (N, Cs, H, W) io_dtype."""
    wg, bg, ws, bs, wo, bo = params      # wg (Co,Cg), ws (Co,Cs), wo (Co,Co)
    N, Cg, H, W = g.shape
    _, Cs, _, _ = s.shape
    Co = wg.shape[0]
    assert Co == Cs, "out * s requires out_channels == in_channels[1]"

    HW = H * W
    io_bytes = jnp.dtype(io_dtype).itemsize
    auto_tile, vmem_budget = _vmem_plan(HW, N, Cg, Cs, Co, io_bytes)
    if tile_p is None:
        tile_p = auto_tile

    # Channels-first: free reshapes, no HBM transpose passes. bf16 I/O halves
    # HBM traffic; MXU is bf16-native on v5e/v6e/v7x.
    g3 = g.reshape(N, Cg, HW).astype(io_dtype)
    s3 = s.reshape(N, Cs, HW).astype(io_dtype)
    wg_c = wg.astype(io_dtype)
    ws_c = ws.astype(io_dtype)
    wo_c = wo.astype(io_dtype)
    bgs = (bg + bs).reshape(Co, 1).astype(jnp.float32)   # fused bias, f32 epilogue
    bo2 = bo.reshape(Co, 1).astype(jnp.float32)

    grid = (N, pl.cdiv(HW, tile_p))

    pix_spec = lambda c: pl.BlockSpec((None, c, tile_p), lambda n, p: (n, 0, p))
    full_spec = lambda r, c: pl.BlockSpec((r, c), lambda n, p: (0, 0))

    cost = pl.CostEstimate(
        flops=2 * N * HW * (Co * Cg + Co * Cs + Co * Co) + 6 * N * HW * Co,
        transcendentals=N * HW * Co,
        bytes_accessed=N * HW * (Cg + 2 * Cs) * io_bytes
        + (Co * Cg + Co * Cs + Co * Co) * io_bytes + 2 * Co * 4,
    )

    out3 = pl.pallas_call(
        _attention_gate_kernel,
        out_shape=jax.ShapeDtypeStruct((N, Cs, HW), io_dtype),
        grid_spec=pltpu.PrefetchScalarGridSpec(
            num_scalar_prefetch=0,
            grid=grid,
            in_specs=[
                pix_spec(Cg),          # g tile   (Cg, tile_p), bf16
                pix_spec(Cs),          # s tile   (Cs, tile_p), bf16
                full_spec(Co, Cg),     # Wg weight (BN folded), bf16
                full_spec(Co, Cs),     # Ws weight (BN folded), bf16
                full_spec(Co, 1),      # bg + bs, f32
                full_spec(Co, Co),     # output conv weight, bf16
                full_spec(Co, 1),      # output conv bias, f32
            ],
            out_specs=pix_spec(Cs),    # (Cs, tile_p): lane-dense bf16 stores
        ),
        compiler_params=pltpu.CompilerParams(
            dimension_semantics=("parallel", "parallel"),
            vmem_limit_bytes=int(vmem_budget)),
        cost_estimate=cost,
    )(g3, s3, wg_c, ws_c, bgs, wo_c, bo2)

    # (N, Cs, HW) is already NCHW up to a free reshape. Output stays in
    # io_dtype (bf16) to keep HBM writeback halved; cast downstream if needed.
    return out3.reshape(N, Cs, H, W)


def init_params(key, in_channels, out_channels):
    """Deterministic synthetic params; BN (eval mode, fresh stats) folded in."""
    Cg, Cs = in_channels
    Co = out_channels
    k = jax.random.split(key, 6)
    eps = 1e-5
    bn_scale = 1.0 / jnp.sqrt(1.0 + eps)  # gamma=1, var=1, mean=0, beta=0

    # Conv2d(k=1) weights stored channels-first: (Cout, Cin).
    wg = jax.random.normal(k[0], (Co, Cg), jnp.float32) * 0.1 * bn_scale
    bg = jax.random.normal(k[1], (Co,), jnp.float32) * 0.1 * bn_scale
    ws = jax.random.normal(k[2], (Co, Cs), jnp.float32) * 0.1 * bn_scale
    bs = jax.random.normal(k[3], (Co,), jnp.float32) * 0.1 * bn_scale
    wo = jax.random.normal(k[4], (Co, Co), jnp.float32) * 0.1
    bo = jax.random.normal(k[5], (Co,), jnp.float32) * 0.1
    return (wg, bg, ws, bs, wo, bo)


def reference(g, s, params):
    """Plain-JAX f32 reference with identical semantics (sanity check)."""
    wg, bg, ws, bs, wo, bo = params
    a = jnp.einsum('oc,nchw->nohw', wg, g) + bg[None, :, None, None]
    b = jnp.einsum('oc,nchw->nohw', ws, s) + bs[None, :, None, None]
    h = jnp.maximum(a + b, 0.0)
    o = jax.nn.sigmoid(jnp.einsum('oc,nchw->nohw', wo, h) + bo[None, :, None, None])
    return o * s


if __name__ == "__main__":
    key = jax.random.PRNGKey(0)
    kg, ks, kp = jax.random.split(key, 3)

    in_channels = (6, 4)   # (g channels, s channels)
    out_channels = 4       # must equal s channels for `out * s`
    N, H, W = 2, 16, 16

    g = jax.random.normal(kg, (N, in_channels[0], H, W), jnp.float32)
    s = jax.random.normal(ks, (N, in_channels[1], H, W), jnp.float32)
    params = init_params(kp, in_channels, out_channels)

    out = attention_gate(g, s, params)
    out = jax.block_until_ready(out)

    ref = reference(g, s, params)
    assert out.shape == (N, out_channels, H, W)
    # Tolerance loosened vs the f32 reference because the kernel carries
    # activations/weights/output in bfloat16 (f32 accumulation inside).
    assert jnp.allclose(out.astype(jnp.float32), ref, atol=5e-2, rtol=5e-2)

    print("KERNEL_OK")
</pallas_src>

<mosaic_0001>
module attributes {stable_mosaic.version = 11 : i64} {
  func.func @_attention_gate_kernel(%arg0: i32, %arg1: i32, %arg2: memref<1x6x256xbf16, #tpu.memory_space<vmem>>, %arg3: memref<1x4x256xbf16, #tpu.memory_space<vmem>>, %arg4: memref<4x6xbf16, #tpu.memory_space<vmem>>, %arg5: memref<4x4xbf16, #tpu.memory_space<vmem>>, %arg6: memref<4x1xf32, #tpu.memory_space<vmem>>, %arg7: memref<4x4xbf16, #tpu.memory_space<vmem>>, %arg8: memref<4x1xf32, #tpu.memory_space<vmem>>, %arg9: memref<1x4x256xbf16, #tpu.memory_space<vmem>>) attributes {dimension_semantics = [#tpu.dimension_semantics<parallel>, #tpu.dimension_semantics<parallel>], iteration_bounds = array<i64: 2, 1>, scalar_prefetch = 0 : i64, scratch_operands = 0 : i64, tpu.core_type = #tpu.core_type<tc>, window_params = [{transform_indices = @transform_0, window_bounds = array<i64: 1, 6, 256>}, {transform_indices = @transform_1, window_bounds = array<i64: 1, 4, 256>}, {pipeline_mode = #tpu.pipeline_mode<synchronous>, transform_indices = @transform_2, window_bounds = array<i64: 4, 6>}, {pipeline_mode = #tpu.pipeline_mode<synchronous>, transform_indices = @transform_3, window_bounds = array<i64: 4, 4>}, {pipeline_mode = #tpu.pipeline_mode<synchronous>, transform_indices = @transform_4, window_bounds = array<i64: 4, 1>}, {pipeline_mode = #tpu.pipeline_mode<synchronous>, transform_indices = @transform_5, window_bounds = array<i64: 4, 4>}, {pipeline_mode = #tpu.pipeline_mode<synchronous>, transform_indices = @transform_6, window_bounds = array<i64: 4, 1>}, {transform_indices = @transform_7, window_bounds = array<i64: 1, 4, 256>}]} {
    %c0 = arith.constant 0 : index
    %c0_0 = arith.constant 0 : index
    %c0_1 = arith.constant 0 : index
    %0 = vector.load %arg2[%c0, %c0_0, %c0_1] : memref<1x6x256xbf16, #tpu.memory_space<vmem>>, vector<1x6x256xbf16>
    %1 = vector.shape_cast %0 : vector<1x6x256xbf16> to vector<6x256xbf16>
    %c0_2 = arith.constant 0 : index
    %c0_3 = arith.constant 0 : index
    %c0_4 = arith.constant 0 : index
    %2 = vector.load %arg3[%c0_2, %c0_3, %c0_4] : memref<1x4x256xbf16, #tpu.memory_space<vmem>>, vector<1x4x256xbf16>
    %3 = vector.shape_cast %2 : vector<1x4x256xbf16> to vector<4x256xbf16>
    %c0_5 = arith.constant 0 : index
    %c0_6 = arith.constant 0 : index
    %4 = vector.load %arg4[%c0_5, %c0_6] : memref<4x6xbf16, #tpu.memory_space<vmem>>, vector<4x6xbf16>
    %cst = arith.constant dense<0.000000e+00> : vector<4x256xf32>
    %5 = tpu.matmul %4, %1, %cst {dimension_numbers = #tpu.dot_dimension_numbers<[1], [0], [0], [1], [0, 0, 1, 1], [], []>} : vector<4x6xbf16>, vector<6x256xbf16>, vector<4x256xf32> -> vector<4x256xf32>
    %c0_7 = arith.constant 0 : index
    %c0_8 = arith.constant 0 : index
    %6 = vector.load %arg5[%c0_7, %c0_8] : memref<4x4xbf16, #tpu.memory_space<vmem>>, vector<4x4xbf16>
    %cst_9 = arith.constant dense<0.000000e+00> : vector<4x256xf32>
    %7 = tpu.matmul %6, %3, %cst_9 {dimension_numbers = #tpu.dot_dimension_numbers<[1], [0], [0], [1], [0, 0, 1, 1], [], []>} : vector<4x4xbf16>, vector<4x256xbf16>, vector<4x256xf32> -> vector<4x256xf32>
    %8 = arith.addf %5, %7 : vector<4x256xf32>
    %c0_10 = arith.constant 0 : index
    %c0_11 = arith.constant 0 : index
    %9 = vector.load %arg6[%c0_10, %c0_11] : memref<4x1xf32, #tpu.memory_space<vmem>>, vector<4x1xf32>
    %10 = vector.broadcast %9 : vector<4x1xf32> to vector<4x256xf32>
    %11 = arith.addf %8, %10 : vector<4x256xf32>
    %cst_12 = arith.constant 0.000000e+00 : f32
    %12 = vector.broadcast %cst_12 : f32 to vector<4x256xf32>
    %13 = arith.maximumf %11, %12 : vector<4x256xf32>
    %c0_13 = arith.constant 0 : index
    %c0_14 = arith.constant 0 : index
    %14 = vector.load %arg7[%c0_13, %c0_14] : memref<4x4xbf16, #tpu.memory_space<vmem>>, vector<4x4xbf16>
    %15 = arith.truncf %13 : vector<4x256xf32> to vector<4x256xbf16>
    %cst_15 = arith.constant dense<0.000000e+00> : vector<4x256xf32>
    %16 = tpu.matmul %14, %15, %cst_15 {dimension_numbers = #tpu.dot_dimension_numbers<[1], [0], [0], [1], [0, 0, 1, 1], [], []>} : vector<4x4xbf16>, vector<4x256xbf16>, vector<4x256xf32> -> vector<4x256xf32>
    %c0_16 = arith.constant 0 : index
    %c0_17 = arith.constant 0 : index
    %17 = vector.load %arg8[%c0_16, %c0_17] : memref<4x1xf32, #tpu.memory_space<vmem>>, vector<4x1xf32>
    %18 = vector.broadcast %17 : vector<4x1xf32> to vector<4x256xf32>
    %19 = arith.addf %16, %18 : vector<4x256xf32>
    %cst_18 = arith.constant 0.000000e+00 : f32
    %20 = vector.broadcast %cst_18 : f32 to vector<4x256xf32>
    %21 = arith.subf %20, %19 : vector<4x256xf32>
    %22 = math.exp %21 : vector<4x256xf32>
    %cst_19 = arith.constant 1.000000e+00 : f32
    %23 = vector.broadcast %cst_19 : f32 to vector<4x256xf32>
    %24 = arith.addf %23, %22 : vector<4x256xf32>
    %cst_20 = arith.constant 1.000000e+00 : f32
    %25 = vector.broadcast %cst_20 : f32 to vector<4x256xf32>
    %26 = arith.divf %25, %24 : vector<4x256xf32>
    %27 = arith.extf %3 : vector<4x256xbf16> to vector<4x256xf32>
    %28 = arith.mulf %26, %27 : vector<4x256xf32>
    %29 = arith.truncf %28 : vector<4x256xf32> to vector<4x256xbf16>
    %c0_21 = arith.constant 0 : index
    %c0_22 = arith.constant 0 : index
    %c0_23 = arith.constant 0 : index
    %30 = vector.load %arg9[%c0_21, %c0_22, %c0_23] : memref<1x4x256xbf16, #tpu.memory_space<vmem>>, vector<1x4x256xbf16>
    %31 = vector.shape_cast %30 : vector<1x4x256xbf16> to vector<4x256xbf16>
    %32 = vector.shape_cast %29 : vector<4x256xbf16> to vector<1x4x256xbf16>
    tpu.vector_store %arg9[%c0_21, %c0_22, %c0_23], %32 {strides = array<i32>} : memref<1x4x256xbf16, #tpu.memory_space<vmem>>, vector<1x4x256xbf16>,
    return
  }
  func.func @transform_0(%arg0: i32, %arg1: i32) -> (i32, i32, i32) {
    %c0_i32 = arith.constant 0 : i32
    %c0_i32_0 = arith.constant 0 : i32
    return %arg0, %c0_i32, %arg1 : i32, i32, i32
  }
  func.func @transform_1(%arg0: i32, %arg1: i32) -> (i32, i32, i32) {
    %c0_i32 = arith.constant 0 : i32
    %c0_i32_0 = arith.constant 0 : i32
    return %arg0, %c0_i32, %arg1 : i32, i32, i32
  }
  func.func @transform_2(%arg0: i32, %arg1: i32) -> (i32, i32) {
    %c0_i32 = arith.constant 0 : i32
    %c0_i32_0 = arith.constant 0 : i32
    %c0_i32_1 = arith.constant 0 : i32
    return %c0_i32, %c0_i32_0 : i32, i32
  }
  func.func @transform_3(%arg0: i32, %arg1: i32) -> (i32, i32) {
    %c0_i32 = arith.constant 0 : i32
    %c0_i32_0 = arith.constant 0 : i32
    %c0_i32_1 = arith.constant 0 : i32
    return %c0_i32, %c0_i32_0 : i32, i32
  }
  func.func @transform_4(%arg0: i32, %arg1: i32) -> (i32, i32) {
    %c0_i32 = arith.constant 0 : i32
    %c0_i32_0 = arith.constant 0 : i32
    %c0_i32_1 = arith.constant 0 : i32
    return %c0_i32, %c0_i32_0 : i32, i32
  }
  func.func @transform_5(%arg0: i32, %arg1: i32) -> (i32, i32) {
    %c0_i32 = arith.constant 0 : i32
    %c0_i32_0 = arith.constant 0 : i32
    %c0_i32_1 = arith.constant 0 : i32
    return %c0_i32, %c0_i32_0 : i32, i32
  }
  func.func @transform_6(%arg0: i32, %arg1: i32) -> (i32, i32) {
    %c0_i32 = arith.constant 0 : i32
    %c0_i32_0 = arith.constant 0 : i32
    %c0_i32_1 = arith.constant 0 : i32
    return %c0_i32, %c0_i32_0 : i32, i32
  }
  func.func @transform_7(%arg0: i32, %arg1: i32) -> (i32, i32, i32) {
    %c0_i32 = arith.constant 0 : i32
    %c0_i32_0 = arith.constant 0 : i32
    return %arg0, %c0_i32, %arg1 : i32, i32, i32
  }
}

</mosaic_0001>

<llo_original>
// kernel: attention_gate.1
$region0: #{attention_gate.1}
  #allocation0 [shape = 'u32[]', space=smem, size = 0x4, offset = 0x4, fixed_abs, tag = 'smem constant byte address 0x4 - core index']
  #allocation1 [shape = 'u32[144,128]{1,0:T(1,128)}', space=vmem, size = 0x12000, scoped, tag = 'internal scratch']
  %s0 = inlined_call_operand.vmem [shape: bf16[2,6,256], index: 0, kind: input, shape index: {}]
  %s1 = inlined_call_operand.vmem [shape: bf16[2,4,256], index: 1, kind: input, shape index: {}]
  %s2 = inlined_call_operand.vmem [shape: bf16[4,6], index: 2, kind: input, shape index: {}]
  %s3 = inlined_call_operand.vmem [shape: bf16[4,4], index: 3, kind: input, shape index: {}]
  %s4 = inlined_call_operand.vmem [shape: f32[4,1], index: 4, kind: input, shape index: {}]
  %s5 = inlined_call_operand.vmem [shape: bf16[4,4], index: 5, kind: input, shape index: {}]
  %s6 = inlined_call_operand.vmem [shape: f32[4,1], index: 6, kind: input, shape index: {}]
  %s7 = inlined_call_operand.vmem [shape: bf16[2,4,256], index: 7, kind: output, shape index: {}]
  %s8 = sld [smem:[#allocation0]]
  $region61: #{attention_gate.1} parent=0
    _
  %s10 = ssub.s32 1, %s8
  %s11 = scalar_select 0, %s10, %s8
  loop: start=0, step=1, limit=4
  $region2: #{attention_gate.1} parent=0 // loop_pre_header
    _
  $region3: #{attention_gate.1} parent=0 // loop_header
    %s13 = sphi 0, %s17
    %p14 = scmp.ge.s32.totalorder %s13, 4
    %s20 = sphi 0, %s32
    %s21 = sphi 0, %s28
    %s22 = sphi 0, %s20
    %s23 = sphi 0, %s21
    %s24 = sphi 0, %s22
    %s25 = sphi 0, %s23
    %s37 = sphi 0, %s39
    %s40 = sphi 0, %s37
    %s41 = sphi 0, %s40
    %s57 = sphi 0, %s41
    %s65 = sphi 0, %s67
    %s68 = sphi 0, %s65
    %s69 = sphi 0, %s68
    %s85 = sphi 0, %s69
    %s89 = sphi 0, %s89
    %s91 = sphi 0, %s89
    %s92 = sphi 0, %s91
    %s106 = sphi 0, %s92
    %s110 = sphi 0, %s110
    %s112 = sphi 0, %s110
    %s113 = sphi 0, %s112
    %s127 = sphi 0, %s113
    %s131 = sphi 0, %s131
    %s133 = sphi 0, %s131
    %s134 = sphi 0, %s133
    %s148 = sphi 0, %s134
    %s152 = sphi 0, %s152
    %s154 = sphi 0, %s152
    %s155 = sphi 0, %s154
    %s169 = sphi 0, %s155
    %s173 = sphi 0, %s173
    %s175 = sphi 0, %s173
    %s176 = sphi 0, %s175
    %s190 = sphi 0, %s176
    %s198 = sphi 0, %s200
    %s201 = sphi 0, %s198
    %s202 = sphi 0, %s201
    %s218 = sphi 0, %s202
  $region4: #{attention_gate.1} parent=0 // loop_header_branch
    %16 = sbr.rel (%p14) target = $region8
  $region5: #{attention_gate.1} parent=0 // loop_body
    %s18 = ssub.s32 %s13, 1
    %s19 = ssub.s32 %s13, 2
    %s26 = sadd.s32 1, %s21
    %p27 = scmp.ge.s32.totalorder %s26, 1
    %s28 = scalar_select %p27, 0, %s26
    %s29 = sadd.s32 1, %s20
    %s30 = scalar_select %p27, %s29, %s20
    %p31 = scmp.ge.s32.totalorder %s30, 2
    %s32 = scalar_select %p31, 0, %s30
    %s33 = ssub.s32 %s20, %s32
    %s34 = ssub.s32 %s21, %s28
    %s35 = sor.u32 %s33, %s34
    %p36 = scmp.eq.s32.totalorder %s35, 0
    %s38 = sadd.s32 %s37, 1
    %s39 = scalar_select %p36, %s37, %s38
    %p42 = pneg %p36
    %p43 = scmp.eq.s32.totalorder %s13, 1
    %p44 = por %p42, %p43
    %p45 = scmp.ne.s32.totalorder %s37, %s40
    %p46 = scmp.eq.s32.totalorder %s13, 0
    %p47 = por %p45, %p46
    %p48 = scmp.ne.s32.totalorder %s37, %s40
    %p49 = scmp.eq.s32.totalorder %s18, 1
    %p50 = por %p48, %p49
    %p51 = scmp.ne.s32.totalorder %s40, %s41
    %p52 = scmp.eq.s32.totalorder %s18, 0
    %p53 = por %p51, %p52
    %p54 = scmp.ne.s32.totalorder %s40, %s41
    %p55 = scmp.eq.s32.totalorder %s19, 1
    %p56 = por %p54, %p55
    %p58 = scmp.ne.s32.totalorder %s41, %s57
    %p59 = scmp.eq.s32.totalorder %s19, 0
    %p60 = por %p58, %p59
    %s61 = ssub.s32 %s20, %s32
    %s62 = ssub.s32 %s21, %s28
    %s63 = sor.u32 %s61, %s62
    %p64 = scmp.eq.s32.totalorder %s63, 0
    %s66 = sadd.s32 %s65, 1
    %s67 = scalar_select %p64, %s65, %s66
    %p70 = pneg %p64
    %p71 = scmp.eq.s32.totalorder %s13, 1
    %p72 = por %p70, %p71
    %p73 = scmp.ne.s32.totalorder %s65, %s68
    %p74 = scmp.eq.s32.totalorder %s13, 0
    %p75 = por %p73, %p74
    %p76 = scmp.ne.s32.totalorder %s65, %s68
    %p77 = scmp.eq.s32.totalorder %s18, 1
    %p78 = por %p76, %p77
    %p79 = scmp.ne.s32.totalorder %s68, %s69
    %p80 = scmp.eq.s32.totalorder %s18, 0
    %p81 = por %p79, %p80
    %p82 = scmp.ne.s32.totalorder %s68, %s69
    %p83 = scmp.eq.s32.totalorder %s19, 1
    %p84 = por %p82, %p83
    %p86 = scmp.ne.s32.totalorder %s69, %s85
    %p87 = scmp.eq.s32.totalorder %s19, 0
    %p88 = por %p86, %p87
    %s90 = sadd.s32 %s89, 1
    %p93 = scmp.eq.s32.totalorder %s13, 1
    %p94 = scmp.ne.s32.totalorder %s89, %s91
    %p95 = scmp.eq.s32.totalorder %s13, 0
    %p96 = por %p94, %p95
    %p97 = scmp.ne.s32.totalorder %s89, %s91
    %p98 = scmp.eq.s32.totalorder %s18, 1
    %p99 = por %p97, %p98
    %p100 = scmp.ne.s32.totalorder %s91, %s92
    %p101 = scmp.eq.s32.totalorder %s18, 0
    %p102 = por %p100, %p101
    %p103 = scmp.ne.s32.totalorder %s91, %s92
    %p104 = scmp.eq.s32.totalorder %s19, 1
    %p105 = por %p103, %p104
    %p107 = scmp.ne.s32.totalorder %s92, %s106
    %p108 = scmp.eq.s32.totalorder %s19, 0
    %p109 = por %p107, %p108
    %s111 = sadd.s32 %s110, 1
    %p114 = scmp.eq.s32.totalorder %s13, 1
    %p115 = scmp.ne.s32.totalorder %s110, %s112
    %p116 = scmp.eq.s32.totalorder %s13, 0
    %p117 = por %p115, %p116
    %p118 = scmp.ne.s32.totalorder %s110, %s112
    %p119 = scmp.eq.s32.totalorder %s18, 1
    %p120 = por %p118, %p119
    %p121 = scmp.ne.s32.totalorder %s112, %s113
    %p122 = scmp.eq.s32.totalorder %s18, 0
    %p123 = por %p121, %p122
    %p124 = scmp.ne.s32.totalorder %s112, %s113
    %p125 = scmp.eq.s32.totalorder %s19, 1
    %p126 = por %p124, %p125
    %p128 = scmp.ne.s32.totalorder %s113, %s127
    %p129 = scmp.eq.s32.totalorder %s19, 0
    %p130 = por %p128, %p129
    %s132 = sadd.s32 %s131, 1
    %p135 = scmp.eq.s32.totalorder %s13, 1
    %p136 = scmp.ne.s32.totalorder %s131, %s133
    %p137 = scmp.eq.s32.totalorder %s13, 0
    %p138 = por %p136, %p137
    %p139 = scmp.ne.s32.totalorder %s131, %s133
    %p140 = scmp.eq.s32.totalorder %s18, 1
    %p141 = por %p139, %p140
    %p142 = scmp.ne.s32.totalorder %s133, %s134
    %p143 = scmp.eq.s32.totalorder %s18, 0
    %p144 = por %p142, %p143
    %p145 = scmp.ne.s32.totalorder %s133, %s134
    %p146 = scmp.eq.s32.totalorder %s19, 1
    %p147 = por %p145, %p146
    %p149 = scmp.ne.s32.totalorder %s134, %s148
    %p150 = scmp.eq.s32.totalorder %s19, 0
    %p151 = por %p149, %p150
    %s153 = sadd.s32 %s152, 1
    %p156 = scmp.eq.s32.totalorder %s13, 1
    %p157 = scmp.ne.s32.totalorder %s152, %s154
    %p158 = scmp.eq.s32.totalorder %s13, 0
    %p159 = por %p157, %p158
    %p160 = scmp.ne.s32.totalorder %s152, %s154
    %p161 = scmp.eq.s32.totalorder %s18, 1
    %p162 = por %p160, %p161
    %p163 = scmp.ne.s32.totalorder %s154, %s155
    %p164 = scmp.eq.s32.totalorder %s18, 0
    %p165 = por %p163, %p164
    %p166 = scmp.ne.s32.totalorder %s154, %s155
    %p167 = scmp.eq.s32.totalorder %s19, 1
    %p168 = por %p166, %p167
    %p170 = scmp.ne.s32.totalorder %s155, %s169
    %p171 = scmp.eq.s32.totalorder %s19, 0
    %p172 = por %p170, %p171
    %s174 = sadd.s32 %s173, 1
    %p177 = scmp.eq.s32.totalorder %s13, 1
    %p178 = scmp.ne.s32.totalorder %s173, %s175
    %p179 = scmp.eq.s32.totalorder %s13, 0
    %p180 = por %p178, %p179
    %p181 = scmp.ne.s32.totalorder %s173, %s175
    %p182 = scmp.eq.s32.totalorder %s18, 1
    %p183 = por %p181, %p182
    %p184 = scmp.ne.s32.totalorder %s175, %s176
    %p185 = scmp.eq.s32.totalorder %s18, 0
    %p186 = por %p184, %p185
    %p187 = scmp.ne.s32.totalorder %s175, %s176
    %p188 = scmp.eq.s32.totalorder %s19, 1
    %p189 = por %p187, %p188
    %p191 = scmp.ne.s32.totalorder %s176, %s190
    %p192 = scmp.eq.s32.totalorder %s19, 0
    %p193 = por %p191, %p192
    %s194 = ssub.s32 %s20, %s32
    %s195 = ssub.s32 %s21, %s28
    %s196 = sor.u32 %s194, %s195
    %p197 = scmp.eq.s32.totalorder %s196, 0
    %s199 = sadd.s32 %s198, 1
    %s200 = scalar_select %p197, %s198, %s199
    %p203 = pneg %p197
    %p204 = scmp.eq.s32.totalorder %s13, 1
    %p205 = por %p203, %p204
    %p206 = scmp.ne.s32.totalorder %s198, %s201
    %p207 = scmp.eq.s32.totalorder %s13, 0
    %p208 = por %p206, %p207
    %p209 = scmp.ne.s32.totalorder %s198, %s201
    %p210 = scmp.eq.s32.totalorder %s18, 1
    %p211 = por %p209, %p210
    %p212 = scmp.ne.s32.totalorder %s201, %s202
    %p213 = scmp.eq.s32.totalorder %s18, 0
    %p214 = por %p212, %p213
    %p215 = scmp.ne.s32.totalorder %s201, %s202
    %p216 = scmp.eq.s32.totalorder %s19, 1
    %p217 = por %p215, %p216
    %p219 = scmp.ne.s32.totalorder %s202, %s218
    %p220 = scmp.eq.s32.totalorder %s19, 0
    %p221 = por %p219, %p220
    %p222 = scmp.le.s32.totalorder 1, %s13
    %p223 = scmp.lt.s32.totalorder %s13, 3
    %p224 = pnand %p222, %p223
    %p225 = pneg %p224
    // Predicated region
    $region9: #{attention_gate.1} parent=5 // pred_check
      _
    $region10: #{attention_gate.1} parent=5 // pred_check_branch
      %227 = sbr.rel (%p224) target = $region12
    $region11: #{attention_gate.1} parent=5 // pred_region
      %s228 = ssub.s32 %s13, 1
      // Predicated region
      $region13: #{attention_gate.1} parent=11 // pred_check
        %p229 = pneg %p102
      $region14: #{attention_gate.1} parent=11 // pred_check_branch
        %231 = sbr.rel (%p229) target = $region16
      $region15: #{attention_gate.1} parent=11 // pred_region
        _
      $region16: #{attention_gate.1} parent=11 // pred_fallthru
        _
      // Predicated region
      $region17: #{attention_gate.1} parent=11 // pred_check
        %p232 = pneg %p123
      $region18: #{attention_gate.1} parent=11 // pred_check_branch
        %234 = sbr.rel (%p232) target = $region20
      $region19: #{attention_gate.1} parent=11 // pred_region
        _
      $region20: #{attention_gate.1} parent=11 // pred_fallthru
        _
      // Predicated region
      $region21: #{attention_gate.1} parent=11 // pred_check
        %p235 = pneg %p144
      $region22: #{attention_gate.1} parent=11 // pred_check_branch
        %237 = sbr.rel (%p235) target = $region24
      $region23: #{attention_gate.1} parent=11 // pred_region
        _
      $region24: #{attention_gate.1} parent=11 // pred_fallthru
        _
      // Predicated region
      $region25: #{attention_gate.1} parent=11 // pred_check
        %p238 = pneg %p165
      $region26: #{attention_gate.1} parent=11 // pred_check_branch
        %240 = sbr.rel (%p238) target = $region28
      $region27: #{attention_gate.1} parent=11 // pred_region
        _
      $region28: #{attention_gate.1} parent=11 // pred_fallthru
        _
      // Predicated region
      $region29: #{attention_gate.1} parent=11 // pred_check
        %p241 = pneg %p186
      $region30: #{attention_gate.1} parent=11 // pred_check_branch
        %243 = sbr.rel (%p241) target = $region32
      $region31: #{attention_gate.1} parent=11 // pred_region
        _
      $region32: #{attention_gate.1} parent=11 // pred_fallthru
        _
    $region12: #{attention_gate.1} parent=5 // pred_fallthru
      _
    %p244 = scmp.lt.s32.totalorder %s13, 2
    // Predicated region
    $region33: #{attention_gate.1} parent=5 // pred_check
      %p245 = pneg %p244
    $region34: #{attention_gate.1} parent=5 // pred_check_branch
      %247 = sbr.rel (%p245) target = $region36
    $region35: #{attention_gate.1} parent=5 // pred_region
      // Predicated region
      $region37: #{attention_gate.1} parent=35 // pred_check
        %p248 = pneg %p47
      $region38: #{attention_gate.1} parent=35 // pred_check_branch
        %250 = sbr.rel (%p248) target = $region40
      $region39: #{attention_gate.1} parent=35 // pred_region
        %s251 = smul.u32 2, %s21
        %p252 = scmp.lt.s32.totalorder %s20, 1
        %s253 = scalar_select %p252, %s20, 1
        %p254 = scmp.lt.s32.totalorder %s251, 1
        %s255 = scalar_select %p254, %s251, 1
        %s256 = smul.addr %s253, 2
        %s257 = sadd.s32 %s255, %s256
        %s258 = smul.addr %s257, 4
        %s259 = scalar_lea.vmem %s0, %s258
        %s260 = smul.u32 2, %s21
      $region40: #{attention_gate.1} parent=35 // pred_fallthru
        _
      // Predicated region
      $region41: #{attention_gate.1} parent=35 // pred_check
        %p261 = pneg %p75
      $region42: #{attention_gate.1} parent=35 // pred_check_branch
        %263 = sbr.rel (%p261) target = $region44
      $region43: #{attention_gate.1} parent=35 // pred_region
        %s264 = smul.u32 2, %s21
        %p265 = scmp.lt.s32.totalorder %s20, 1
        %s266 = scalar_select %p265, %s20, 1
        %p267 = scmp.lt.s32.totalorder %s264, 1
        %s268 = scalar_select %p267, %s264, 1
        %s269 = smul.addr %s266, 2
        %s270 = sadd.s32 %s268, %s269
        %s271 = smul.addr %s270, 2
        %s272 = scalar_lea.vmem %s1, %s271
        %s273 = smul.u32 2, %s21
      $region44: #{attention_gate.1} parent=35 // pred_fallthru
        _
    $region36: #{attention_gate.1} parent=5 // pred_fallthru
      _
    %p274 = scmp.le.s32.totalorder 1, %s13
    %p275 = scmp.lt.s32.totalorder %s13, 3
    %p276 = pnand %p274, %p275
    %p277 = pneg %p276
    // Predicated region
    $region45: #{attention_gate.1} parent=5 // pred_check
      _
    $region46: #{attention_gate.1} parent=5 // pred_check_branch
      %279 = sbr.rel (%p276) target = $region48
    $region47: #{attention_gate.1} parent=5 // pred_region
      %s280 = ssub.s32 %s13, 1
      %s281 = smul.u32 2, %s23
      %p282 = scmp.lt.s32.totalorder %s22, 1
      %s283 = scalar_select %p282, %s22, 1
      %p284 = scmp.lt.s32.totalorder %s281, 1
      %s285 = scalar_select %p284, %s281, 1
      %s286 = smul.addr %s283, 2
      %s287 = sadd.s32 %s285, %s286
      %s288 = smul.addr %s287, 4
      %s289 = scalar_lea.vmem %s0, %s288
      %p290 = pneg %p53
      %p291 = pneg %p50
      %s292 = smul.u32 2, %s23
      %p293 = scmp.lt.s32.totalorder %s22, 1
      %s294 = scalar_select %p293, %s22, 1
      %p295 = scmp.lt.s32.totalorder %s292, 1
      %s296 = scalar_select %p295, %s292, 1
      %s297 = smul.addr %s294, 2
      %s298 = sadd.s32 %s296, %s297
      %s299 = smul.addr %s298, 2
      %s300 = scalar_lea.vmem %s1, %s299
      %p301 = pneg %p81
      %p302 = pneg %p78
      %p303 = pneg %p102
      %p304 = pneg %p99
      %p305 = pneg %p123
      %p306 = pneg %p120
      %p307 = pneg %p144
      %p308 = pneg %p141
      %p309 = pneg %p165
      %p310 = pneg %p162
      %p311 = pneg %p186
      %p312 = pneg %p183
      %p313 = pneg %p214
      %p314 = pneg %p211
      %s315 = smul.u32 2, %s23
      %p316 = scmp.lt.s32.totalorder %s22, 1
      %s317 = scalar_select %p316, %s22, 1
      %p318 = scmp.lt.s32.totalorder %s315, 1
      %s319 = scalar_select %p318, %s315, 1
      %s320 = smul.addr %s317, 2
      %s321 = sadd.s32 %s319, %s320
      %s322 = smul.addr %s321, 2
      %s323 = scalar_lea.vmem %s7, %s322
      %s324 = smul.u32 2, %s23
      %p325 = scmp.lt.s32.totalorder %s22, 1
      %s326 = scalar_select %p325, %s22, 1
      %p327 = scmp.lt.s32.totalorder %s324, 1
      %s328 = scalar_select %p327, %s324, 1
      %s329 = smul.addr %s326, 2
      %s330 = sadd.s32 %s328, %s329
      %s331 = smul.addr %s330, 4
      %s332 = scalar_lea.vmem %s0, %s331
      %s333 = smul.u32 2, %s23
      %s334 = smul.u32 2, %s23
      %p335 = scmp.lt.s32.totalorder %s22, 1
      %s336 = scalar_select %p335, %s22, 1
      %p337 = scmp.lt.s32.totalorder %s334, 1
      %s338 = scalar_select %p337, %s334, 1
      %s339 = smul.addr %s336, 2
      %s340 = sadd.s32 %s338, %s339
      %s341 = smul.addr %s340, 2
      %s342 = scalar_lea.vmem %s1, %s341
      %s343 = smul.u32 2, %s23
      %s344 = smul.u32 2, %s23
      %p345 = scmp.lt.s32.totalorder %s22, 1
      %s346 = scalar_select %p345, %s22, 1
      %p347 = scmp.lt.s32.totalorder %s344, 1
      %s348 = scalar_select %p347, %s344, 1
      %s349 = smul.addr %s346, 2
      %s350 = sadd.s32 %s348, %s349
      %s351 = smul.addr %s350, 2
      %s352 = scalar_lea.vmem %s7, %s351
      %s353 = smul.u32 2, %s23
      %v355 = vld [vmem:[%s332] sm:$0x77]
      %v356 = vld [vmem:[%s342] sm:$0xf]
      %v357 = vld [vmem:[%s2] sm:$0x3]
      %v358 = vld [vmem:[%s3] sm:$0x3]
      %v361 = vunpack.c.l.s4 1983009808
      %v362 = vunpack.c.0.s8 %v361
      %v363 = vlaneseq
      %v364 = vshrl.u32 %v363, 7
      %v365 = vsub.s32 %v362, %v364
      %v366 = vrot.slane %v356, %v365
      %v367 = vcombine.high %v366, %v366
      %vm368 = vcmask 31744
      %v370 = vsel %vm368, %v358, 0
      %vm372 = vcmask 1041408
      %v374 = vsel %vm372, %v366, 0
      %v377 = vsel %vm372, %v367, 0
      %379 = vmatprep.subr.bf16.mxu0 0
      %380 = vmatpush1.bf16.msra.mxu0 0
      %381 = vmatprep.subr.bf16.mxu0 0
      %382 = vmatpush1.bf16.msra.mxu0 0
      %383 = vmatprep.subr.bf16.mxu0 0
      %384 = vmatpush1.bf16.msra.mxu0 0
      %385 = vmatprep.subr.bf16.mxu0 0
      %386 = vmatpush1.bf16.msra.mxu0 0
      %387 = vmatprep.subr.bf16.mxu0 0
      %388 = vmatpush1.bf16.msra.mxu0 0
      %389 = vmatprep.subr.bf16.mxu0 0
      %390 = vmatpush1.bf16.msra.mxu0 0
      %391 = vmatprep.subr.bf16.mxu0 0
      %392 = vmatpush1.bf16.msra.mxu0 0
      %393 = vmatprep.subr.bf16.mxu0 %v377
      %394 = vmatpush1.bf16.msra.mxu0 %v374
      %395 = vmatprep.subr.bf16.mxu0 0
      %396 = vmatpush2.bf16.msra.mxu0 0
      %397 = vmatprep.subr.bf16.mxu0 0
      %398 = vmatpush2.bf16.msra.mxu0 0
      %399 = vmatprep.subr.bf16.mxu0 0
      %400 = vmatpush2.bf16.msra.mxu0 0
      %401 = vmatprep.subr.bf16.mxu0 0
      %402 = vmatpush2.bf16.msra.mxu0 0
      %403 = vmatprep.subr.bf16.mxu0 0
      %404 = vmatpush2.bf16.msra.mxu0 0
      %405 = vmatprep.subr.bf16.mxu0 0
      %406 = vmatpush2.bf16.msra.mxu0 0
      %407 = vmatprep.subr.bf16.mxu0 0
      %408 = vmatpush2.bf16.msra.mxu0 0
      %409 = vmatprep.subr.bf16.mxu0 0
      %410 = vmatpush2.bf16.msra.mxu0 0
      %411 = vmatprep.mubr.bf16.mxu0 0
      %412 = vmatmul.mubr.bf16.gmra.mxu0 %v370
      %v413 = vpop.f32.mrf.mxu0
      %v414 = vadd.f32 0.0, %v413
      %v415 = vpop.f32.mrf.mxu0
      %v416 = vadd.f32 0.0, %v415
      %v417 = vpop.f32.mrf.mxu0
      %v418 = vpop.f32.mrf.mxu0
      %419 = vdwg.mxu0
      %v421 = vunpack.c.l.b16 %v355
      %v422 = vunpack.c.h.b16 %v355
      %v423 = vpack.c.b16 %v421, %v421
      %v424 = vpack.c.b16 %v422, %v422
      %vm425 = vcmask 48128
      %v427 = vsel %vm425, %v357, 0
      %vm429 = vcmask 1042432
      %v431 = vsel %vm429, %v423, 0
      %v434 = vsel %vm429, %v424, 0
      %436 = vmatprep.subr.bf16.mxu0 0
      %437 = vmatpush1.bf16.msra.mxu0 0
      %438 = vmatprep.subr.bf16.mxu0 0
      %439 = vmatpush1.bf16.msra.mxu0 0
      %440 = vmatprep.subr.bf16.mxu0 0
      %441 = vmatpush1.bf16.msra.mxu0 0
      %442 = vmatprep.subr.bf16.mxu0 0
      %443 = vmatpush1.bf16.msra.mxu0 0
      %444 = vmatprep.subr.bf16.mxu0 0
      %445 = vmatpush1.bf16.msra.mxu0 0
      %446 = vmatprep.subr.bf16.mxu0 0
      %447 = vmatpush1.bf16.msra.mxu0 0
      %448 = vmatprep.subr.bf16.mxu0 0
      %449 = vmatpush1.bf16.msra.mxu0 0
      %450 = vmatprep.subr.bf16.mxu0 %v434
      %451 = vmatpush1.bf16.msra.mxu0 %v431
      %452 = vmatprep.subr.bf16.mxu0 0
      %453 = vmatpush2.bf16.msra.mxu0 0
      %454 = vmatprep.subr.bf16.mxu0 0
      %455 = vmatpush2.bf16.msra.mxu0 0
      %456 = vmatprep.subr.bf16.mxu0 0
      %457 = vmatpush2.bf16.msra.mxu0 0
      %458 = vmatprep.subr.bf16.mxu0 0
      %459 = vmatpush2.bf16.msra.mxu0 0
      %460 = vmatprep.subr.bf16.mxu0 0
      %461 = vmatpush2.bf16.msra.mxu0 0
      %462 = vmatprep.subr.bf16.mxu0 0
      %463 = vmatpush2.bf16.msra.mxu0 0
      %464 = vmatprep.subr.bf16.mxu0 0
      %465 = vmatpush2.bf16.msra.mxu0 0
      %466 = vmatprep.subr.bf16.mxu0 0
      %467 = vmatpush2.bf16.msra.mxu0 0
      %468 = vmatprep.mubr.bf16.mxu0 0
      %469 = vmatmul.mubr.bf16.gmra.mxu0 %v427
      %v470 = vpop.f32.mrf.mxu0
      %v471 = vadd.f32 %v414, %v470
      %v472 = vpop.f32.mrf.mxu0
      %v473 = vadd.f32 %v416, %v472
      %v474 = vpop.f32.mrf.mxu0
      %v475 = vpop.f32.mrf.mxu0
      %476 = vdwg.mxu0
      %v477 = vld [vmem:[%s4] sm:$0xf]
      %479 = vset.pattern.permute.xlu0 0
      %480 = vperm.xlu0 %479, %v477
      %v481 = vpop.permute.xlu0 %480
      %v483 = vadd.f32 %v471, %v481
      %v484 = vadd.f32 %v473, %v481
      %v485 = vmax.f32 %v483, 0.0
      %v486 = vmax.f32 %v484, 0.0
      %v487 = vld [vmem:[%s5] sm:$0x3]
      %v488 = vpack.c.bf16 %v485, %v485
      %v489 = vpack.c.bf16 %v486, %v486
      %v490 = vld [vmem:[%s6] sm:$0xf]
      %492 = vset.pattern.permute.xlu0 0
      %493 = vperm.xlu0 %492, %v490
      %v494 = vpop.permute.xlu0 %493
      %v497 = vsel %vm368, %v487, 0
      %v500 = vsel %vm372, %v488, 0
      %v503 = vsel %vm372, %v489, 0
      %505 = vmatprep.subr.bf16.mxu0 0
      %506 = vmatpush1.bf16.msra.mxu0 0
      %507 = vmatprep.subr.bf16.mxu0 0
      %508 = vmatpush1.bf16.msra.mxu0 0
      %509 = vmatprep.subr.bf16.mxu0 0
      %510 = vmatpush1.bf16.msra.mxu0 0
      %511 = vmatprep.subr.bf16.mxu0 0
      %512 = vmatpush1.bf16.msra.mxu0 0
      %513 = vmatprep.subr.bf16.mxu0 0
      %514 = vmatpush1.bf16.msra.mxu0 0
      %515 = vmatprep.subr.bf16.mxu0 0
      %516 = vmatpush1.bf16.msra.mxu0 0
      %517 = vmatprep.subr.bf16.mxu0 0
      %518 = vmatpush1.bf16.msra.mxu0 0
      %519 = vmatprep.subr.bf16.mxu0 %v503
      %520 = vmatpush1.bf16.msra.mxu0 %v500
      %521 = vmatprep.subr.bf16.mxu0 0
      %522 = vmatpush2.bf16.msra.mxu0 0
      %523 = vmatprep.subr.bf16.mxu0 0
      %524 = vmatpush2.bf16.msra.mxu0 0
      %525 = vmatprep.subr.bf16.mxu0 0
      %526 = vmatpush2.bf16.msra.mxu0 0
      %527 = vmatprep.subr.bf16.mxu0 0
      %528 = vmatpush2.bf16.msra.mxu0 0
      %529 = vmatprep.subr.bf16.mxu0 0
      %530 = vmatpush2.bf16.msra.mxu0 0
      %531 = vmatprep.subr.bf16.mxu0 0
      %532 = vmatpush2.bf16.msra.mxu0 0
      %533 = vmatprep.subr.bf16.mxu0 0
      %534 = vmatpush2.bf16.msra.mxu0 0
      %535 = vmatprep.subr.bf16.mxu0 0
      %536 = vmatpush2.bf16.msra.mxu0 0
      %537 = vmatprep.mubr.bf16.mxu0 0
      %538 = vmatmul.mubr.bf16.gmra.mxu0 %v497
      %v539 = vpop.f32.mrf.mxu0
      %v540 = vadd.f32 %v494, %v539
      %v541 = vpop.f32.mrf.mxu0
      %v542 = vadd.f32 %v494, %v541
      %v543 = vpop.f32.mrf.mxu0
      %v544 = vpop.f32.mrf.mxu0
      %545 = vdwg.mxu0
      %v546 = vsub.f32 0.0, %v540
      %v547 = vsub.f32 0.0, %v542
      %v548 = vmul.f32 %v546, 1.442695
      %v549 = vpow.pop %v548
      %v550 = vmul.f32 %v547, 1.442695
      %v551 = vpow.pop %v550
      %v552 = vadd.f32 %v549, 1.0
      %v553 = vadd.f32 %v551, 1.0
      %v554 = vrcp.pop %v552
      %v555 = vmul.f32 1.0, %v554
      %v556 = vrcp.pop %v553
      %v557 = vmul.f32 1.0, %v556
      %v558 = vunpack.c.l.bf16 %v356
      %v560 = vcombine.high %v558, %v558
      %v562 = vmul.f32 %v555, %v558
      %v563 = vmul.f32 %v557, %v560
      %v564 = vpack.c.bf16 %v562, %v562
      %v565 = vpack.c.bf16 %v563, %v563
      %v568 = vcombine.low %v564, %v565
      %v570 = vunpack.c.l.s4 1983009808
      %v571 = vunpack.c.0.s8 %v570
      %v572 = vlaneseq
      %v573 = vshrl.u32 %v572, 7
      %v574 = vsub.s32 %v571, %v573
      %v575 = vrot.slane %v568, %v574
      %577 = vst [vmem:[%s352] sm:$0xf] %v575
      %s578 = smul.u32 2, %s23
      %p579 = scmp.lt.s32.totalorder %s22, 1
      %s580 = scalar_select %p579, %s22, 1
      %p581 = scmp.lt.s32.totalorder %s578, 1
      %s582 = scalar_select %p581, %s578, 1
      %s583 = smul.addr %s580, 2
      %s584 = sadd.s32 %s582, %s583
      %s585 = smul.addr %s584, 2
      %s586 = scalar_lea.vmem %s7, %s585
      // Predicated region
      $region49: #{attention_gate.1} parent=47 // pred_check
        %p587 = pneg %p211
      $region50: #{attention_gate.1} parent=47 // pred_check_branch
        %589 = sbr.rel (%p587) target = $region52
      $region51: #{attention_gate.1} parent=47 // pred_region
        %s590 = smul.u32 2, %s23
      $region52: #{attention_gate.1} parent=47 // pred_fallthru
        _
    $region48: #{attention_gate.1} parent=5 // pred_fallthru
      _
    %p591 = scmp.le.s32.totalorder 2, %s13
    // Predicated region
    $region53: #{attention_gate.1} parent=5 // pred_check
      %p592 = pneg %p591
    $region54: #{attention_gate.1} parent=5 // pred_check_branch
      %594 = sbr.rel (%p592) target = $region56
    $region55: #{attention_gate.1} parent=5 // pred_region
      %s595 = ssub.s32 %s13, 2
      // Predicated region
      $region57: #{attention_gate.1} parent=55 // pred_check
        %p596 = pneg %p217
      $region58: #{attention_gate.1} parent=55 // pred_check_branch
        %598 = sbr.rel (%p596) target = $region60
      $region59: #{attention_gate.1} parent=55 // pred_region
        %s599 = smul.u32 2, %s25
        %p600 = scmp.lt.s32.totalorder %s24, 1
        %s601 = scalar_select %p600, %s24, 1
        %p602 = scmp.lt.s32.totalorder %s599, 1
        %s603 = scalar_select %p602, %s599, 1
        %s604 = smul.addr %s601, 2
        %s605 = sadd.s32 %s603, %s604
        %s606 = smul.addr %s605, 2
        %s607 = scalar_lea.vmem %s7, %s606
      $region60: #{attention_gate.1} parent=55 // pred_fallthru
        _
    $region56: #{attention_gate.1} parent=5 // pred_fallthru
      _
  $region6: #{attention_gate.1} parent=0 // loop_footer
    %s17 = sadd.s32 1, %s13
  $region7: #{attention_gate.1} parent=0 // loop_footer_branch
    %12 = sbr.rel target = $region3
  $region8: #{attention_gate.1} parent=0 // loop_exit
    _

</llo_original>
